<compile_context>
chip_gen: v5e
topology: v5e:2x2
jax: 0.10.0
libtpu: 0.0.40
codegen_flags: <defaults>
</compile_context>

<pallas_src>
import jax
import jax.numpy as jnp
from jax import lax
from jax.experimental import pallas as pl
from jax.experimental.pallas import tpu as pltpu

H = 2  # hidden size (fixed by the module: nn.RNN(1, 2), nn.Linear(2, 1))


def rnn_kernel(x_ref, h0_ref, wih_ref, whh_ref, bih_ref, bhh_ref, wout_ref, bout_ref,
               pre_ref, ht_ref):
    """Fused ReLU-RNN recurrence + Linear(2,1) projection.

    x_ref   : (T, B)  VMEM   input sequence (input_size == 1, squeezed)
    h0_ref  : (H, B)  VMEM   initial hidden state, one row per hidden unit
    wih_ref : (H, 1)  SMEM   W_ih
    whh_ref : (H, H)  SMEM   W_hh
    bih_ref : (H,)    SMEM   b_ih
    bhh_ref : (H,)    SMEM   b_hh
    wout_ref: (1, H)  SMEM   W_out (projection)
    bout_ref: (1,)    SMEM   b_out
    pre_ref : (T, B)  VMEM   projected outputs   pre[t] = h_t @ W_out^T + b_out
    ht_ref  : (H, B)  VMEM   final hidden state
    """
    T = x_ref.shape[0]

    # Loop-invariant scalar splats (hoisted above the unrolled loop).
    # h_new[j] = relu(x*W_ih[j,0] + b_ih[j] + b_hh[j] + sum_i h_prev[i]*W_hh[j,i])
    w00 = whh_ref[0, 0]
    w01 = whh_ref[0, 1]
    w10 = whh_ref[1, 0]
    w11 = whh_ref[1, 1]
    wo0 = wout_ref[0, 0]
    wo1 = wout_ref[0, 1]
    bo = bout_ref[0]

    x = x_ref[...]                                           # (T, B)

    # Pre-fold input term + biases per hidden unit, off the serial chain.
    # (vector op with scalar-splat operands; left-to-right keeps it all on the VPU)
    xwb0 = x * wih_ref[0, 0] + bih_ref[0] + bhh_ref[0]       # (T, B)
    xwb1 = x * wih_ref[1, 0] + bih_ref[1] + bhh_ref[1]       # (T, B)

    # Hidden units carried as separate (1, B) vregs -> per-step update is pure VALU.
    h0 = h0_ref[0:1, :]                                      # (1, B)
    h1 = h0_ref[1:2, :]                                      # (1, B)

    for t in range(T):                                       # fully unrolled (T static)
        a0 = xwb0[t:t + 1, :] + h0 * w00 + h1 * w01          # (1, B)
        a1 = xwb1[t:t + 1, :] + h0 * w10 + h1 * w11          # (1, B)
        h0 = jnp.maximum(a0, 0.0)                            # relu
        h1 = jnp.maximum(a1, 0.0)
        # Fused Linear(2,1): does not feed the recurrence -> off the serial chain.
        pre_ref[t:t + 1, :] = h0 * wo0 + h1 * wo1 + bo

    ht_ref[0:1, :] = h0
    ht_ref[1:2, :] = h1


def rnn_forward(x, h0, params):
    """x: (T, B, 1) f32, h0: (1, B, H) f32 -> (pre (T, B, 1), h (1, B, H))"""
    T, B, _ = x.shape
    w_ih, w_hh, b_ih, b_hh, w_out, b_out = params

    x2 = x.reshape(T, B)                  # drop trailing-1 lane (dense layout)
    h0_t = jnp.transpose(h0[0])           # (H, B): row i = hidden unit i across batch

    vmem = pl.BlockSpec(memory_space=pltpu.MemorySpace.VMEM)
    smem = pl.BlockSpec(memory_space=pltpu.MemorySpace.SMEM)

    pre2, ht = pl.pallas_call(
        rnn_kernel,
        out_shape=(jax.ShapeDtypeStruct((T, B), jnp.float32),
                   jax.ShapeDtypeStruct((H, B), jnp.float32)),
        in_specs=[vmem, vmem, smem, smem, smem, smem, smem, smem],
        out_specs=(vmem, vmem),
    )(x2, h0_t, w_ih, w_hh, b_ih, b_hh, w_out, b_out)

    pre = pre2.reshape(T, B, 1)
    h = jnp.transpose(ht).reshape(1, B, H)
    return pre, h


def rnn_reference(x, h0, params):
    """Pure-JAX reference matching torch nn.RNN(relu) + nn.Linear semantics."""
    w_ih, w_hh, b_ih, b_hh, w_out, b_out = params

    def step(h, x_t):
        h_new = jax.nn.relu(x_t @ w_ih.T + h @ w_hh.T + b_ih + b_hh)
        return h_new, h_new

    h_final, outs = lax.scan(step, h0[0], x)
    pre = outs @ w_out.T + b_out
    return pre, h_final[None]


if __name__ == "__main__":
    T, B = 8, 2  # seq_len=8, batch=2, input_size=1, hidden_size=2

    key = jax.random.PRNGKey(0)
    ks = jax.random.split(key, 8)
    bound = 1.0 / jnp.sqrt(jnp.float32(H))        # PyTorch default uniform init bound
    w_ih = jax.random.uniform(ks[0], (H, 1), jnp.float32, -bound, bound)
    w_hh = jax.random.uniform(ks[1], (H, H), jnp.float32, -bound, bound)
    b_ih = jax.random.uniform(ks[2], (H,), jnp.float32, -bound, bound)
    b_hh = jax.random.uniform(ks[3], (H,), jnp.float32, -bound, bound)
    w_out = jax.random.uniform(ks[4], (1, H), jnp.float32, -bound, bound)
    b_out = jax.random.uniform(ks[5], (1,), jnp.float32, -bound, bound)
    params = (w_ih, w_hh, b_ih, b_hh, w_out, b_out)

    x = jax.random.uniform(ks[6], (T, B, 1), jnp.float32)    # e.g. scaled case counts
    h0 = jnp.zeros((1, B, H), jnp.float32)

    pre, h = rnn_forward(x, h0, params)
    jax.block_until_ready((pre, h))

    pre_ref, h_ref = rnn_reference(x, h0, params)
    assert pre.shape == (T, B, 1) and h.shape == (1, B, H)
    assert jnp.allclose(pre, pre_ref, atol=1e-5), "pre mismatch vs reference"
    assert jnp.allclose(h, h_ref, atol=1e-5), "hidden state mismatch vs reference"

    print("KERNEL_OK")
</pallas_src>

<mosaic_0001>
module attributes {stable_mosaic.version = 11 : i64} {
  func.func @rnn_kernel(%arg0: memref<8x2xf32, #tpu.memory_space<vmem>>, %arg1: memref<2x2xf32, #tpu.memory_space<vmem>>, %arg2: memref<2x1xf32, #tpu.memory_space<smem>>, %arg3: memref<2x2xf32, #tpu.memory_space<smem>>, %arg4: memref<2xf32, #tpu.memory_space<smem>>, %arg5: memref<2xf32, #tpu.memory_space<smem>>, %arg6: memref<1x2xf32, #tpu.memory_space<smem>>, %arg7: memref<1xf32, #tpu.memory_space<smem>>, %arg8: memref<8x2xf32, #tpu.memory_space<vmem>>, %arg9: memref<2x2xf32, #tpu.memory_space<vmem>>) attributes {dimension_semantics = [], scalar_prefetch = 0 : i64, scratch_operands = 0 : i64, tpu.core_type = #tpu.core_type<tc>} {
    %c0 = arith.constant 0 : index
    %c0_0 = arith.constant 0 : index
    %0 = memref.load %arg3[%c0, %c0_0] : memref<2x2xf32, #tpu.memory_space<smem>>
    %c0_1 = arith.constant 0 : index
    %c1 = arith.constant 1 : index
    %1 = memref.load %arg3[%c0_1, %c1] : memref<2x2xf32, #tpu.memory_space<smem>>
    %c1_2 = arith.constant 1 : index
    %c0_3 = arith.constant 0 : index
    %2 = memref.load %arg3[%c1_2, %c0_3] : memref<2x2xf32, #tpu.memory_space<smem>>
    %c1_4 = arith.constant 1 : index
    %c1_5 = arith.constant 1 : index
    %3 = memref.load %arg3[%c1_4, %c1_5] : memref<2x2xf32, #tpu.memory_space<smem>>
    %c0_6 = arith.constant 0 : index
    %c0_7 = arith.constant 0 : index
    %4 = memref.load %arg6[%c0_6, %c0_7] : memref<1x2xf32, #tpu.memory_space<smem>>
    %c0_8 = arith.constant 0 : index
    %c1_9 = arith.constant 1 : index
    %5 = memref.load %arg6[%c0_8, %c1_9] : memref<1x2xf32, #tpu.memory_space<smem>>
    %c0_10 = arith.constant 0 : index
    %6 = memref.load %arg7[%c0_10] : memref<1xf32, #tpu.memory_space<smem>>
    %c0_11 = arith.constant 0 : index
    %c0_12 = arith.constant 0 : index
    %7 = vector.load %arg0[%c0_11, %c0_12] : memref<8x2xf32, #tpu.memory_space<vmem>>, vector<8x2xf32>
    %c0_13 = arith.constant 0 : index
    %c0_14 = arith.constant 0 : index
    %8 = memref.load %arg2[%c0_13, %c0_14] : memref<2x1xf32, #tpu.memory_space<smem>>
    %9 = vector.broadcast %8 : f32 to vector<8x2xf32>
    %10 = arith.mulf %7, %9 : vector<8x2xf32>
    %c0_15 = arith.constant 0 : index
    %11 = memref.load %arg4[%c0_15] : memref<2xf32, #tpu.memory_space<smem>>
    %12 = vector.broadcast %11 : f32 to vector<8x2xf32>
    %13 = arith.addf %10, %12 : vector<8x2xf32>
    %c0_16 = arith.constant 0 : index
    %14 = memref.load %arg5[%c0_16] : memref<2xf32, #tpu.memory_space<smem>>
    %15 = vector.broadcast %14 : f32 to vector<8x2xf32>
    %16 = arith.addf %13, %15 : vector<8x2xf32>
    %c1_17 = arith.constant 1 : index
    %c0_18 = arith.constant 0 : index
    %17 = memref.load %arg2[%c1_17, %c0_18] : memref<2x1xf32, #tpu.memory_space<smem>>
    %18 = vector.broadcast %17 : f32 to vector<8x2xf32>
    %19 = arith.mulf %7, %18 : vector<8x2xf32>
    %c1_19 = arith.constant 1 : index
    %20 = memref.load %arg4[%c1_19] : memref<2xf32, #tpu.memory_space<smem>>
    %21 = vector.broadcast %20 : f32 to vector<8x2xf32>
    %22 = arith.addf %19, %21 : vector<8x2xf32>
    %c1_20 = arith.constant 1 : index
    %23 = memref.load %arg5[%c1_20] : memref<2xf32, #tpu.memory_space<smem>>
    %24 = vector.broadcast %23 : f32 to vector<8x2xf32>
    %25 = arith.addf %22, %24 : vector<8x2xf32>
    %c0_21 = arith.constant 0 : index
    %c0_22 = arith.constant 0 : index
    %26 = vector.load %arg1[%c0_21, %c0_22] : memref<2x2xf32, #tpu.memory_space<vmem>>, vector<1x2xf32>
    %c1_23 = arith.constant 1 : index
    %c0_24 = arith.constant 0 : index
    %27 = vector.load %arg1[%c1_23, %c0_24] : memref<2x2xf32, #tpu.memory_space<vmem>>, vector<1x2xf32>
    %28 = vector.extract_strided_slice %16 {offsets = [0, 0], sizes = [1, 2], strides = [1, 1]} : vector<8x2xf32> to vector<1x2xf32>
    %29 = vector.broadcast %0 : f32 to vector<1x2xf32>
    %30 = arith.mulf %26, %29 : vector<1x2xf32>
    %31 = arith.addf %28, %30 : vector<1x2xf32>
    %32 = vector.broadcast %1 : f32 to vector<1x2xf32>
    %33 = arith.mulf %27, %32 : vector<1x2xf32>
    %34 = arith.addf %31, %33 : vector<1x2xf32>
    %35 = vector.extract_strided_slice %25 {offsets = [0, 0], sizes = [1, 2], strides = [1, 1]} : vector<8x2xf32> to vector<1x2xf32>
    %36 = vector.broadcast %2 : f32 to vector<1x2xf32>
    %37 = arith.mulf %26, %36 : vector<1x2xf32>
    %38 = arith.addf %35, %37 : vector<1x2xf32>
    %39 = vector.broadcast %3 : f32 to vector<1x2xf32>
    %40 = arith.mulf %27, %39 : vector<1x2xf32>
    %41 = arith.addf %38, %40 : vector<1x2xf32>
    %cst = arith.constant 0.000000e+00 : f32
    %42 = vector.broadcast %cst : f32 to vector<1x2xf32>
    %43 = arith.maximumf %34, %42 : vector<1x2xf32>
    %cst_25 = arith.constant 0.000000e+00 : f32
    %44 = vector.broadcast %cst_25 : f32 to vector<1x2xf32>
    %45 = arith.maximumf %41, %44 : vector<1x2xf32>
    %46 = vector.broadcast %4 : f32 to vector<1x2xf32>
    %47 = arith.mulf %43, %46 : vector<1x2xf32>
    %48 = vector.broadcast %5 : f32 to vector<1x2xf32>
    %49 = arith.mulf %45, %48 : vector<1x2xf32>
    %50 = arith.addf %47, %49 : vector<1x2xf32>
    %51 = vector.broadcast %6 : f32 to vector<1x2xf32>
    %52 = arith.addf %50, %51 : vector<1x2xf32>
    %c0_26 = arith.constant 0 : index
    %c0_27 = arith.constant 0 : index
    %53 = vector.load %arg8[%c0_26, %c0_27] : memref<8x2xf32, #tpu.memory_space<vmem>>, vector<1x2xf32>
    tpu.vector_store %arg8[%c0_26, %c0_27], %52 {strides = array<i32>} : memref<8x2xf32, #tpu.memory_space<vmem>>, vector<1x2xf32>,
    %54 = vector.extract_strided_slice %16 {offsets = [1, 0], sizes = [1, 2], strides = [1, 1]} : vector<8x2xf32> to vector<1x2xf32>
    %55 = vector.broadcast %0 : f32 to vector<1x2xf32>
    %56 = arith.mulf %43, %55 : vector<1x2xf32>
    %57 = arith.addf %54, %56 : vector<1x2xf32>
    %58 = vector.broadcast %1 : f32 to vector<1x2xf32>
    %59 = arith.mulf %45, %58 : vector<1x2xf32>
    %60 = arith.addf %57, %59 : vector<1x2xf32>
    %61 = vector.extract_strided_slice %25 {offsets = [1, 0], sizes = [1, 2], strides = [1, 1]} : vector<8x2xf32> to vector<1x2xf32>
    %62 = vector.broadcast %2 : f32 to vector<1x2xf32>
    %63 = arith.mulf %43, %62 : vector<1x2xf32>
    %64 = arith.addf %61, %63 : vector<1x2xf32>
    %65 = vector.broadcast %3 : f32 to vector<1x2xf32>
    %66 = arith.mulf %45, %65 : vector<1x2xf32>
    %67 = arith.addf %64, %66 : vector<1x2xf32>
    %cst_28 = arith.constant 0.000000e+00 : f32
    %68 = vector.broadcast %cst_28 : f32 to vector<1x2xf32>
    %69 = arith.maximumf %60, %68 : vector<1x2xf32>
    %cst_29 = arith.constant 0.000000e+00 : f32
    %70 = vector.broadcast %cst_29 : f32 to vector<1x2xf32>
    %71 = arith.maximumf %67, %70 : vector<1x2xf32>
    %72 = vector.broadcast %4 : f32 to vector<1x2xf32>
    %73 = arith.mulf %69, %72 : vector<1x2xf32>
    %74 = vector.broadcast %5 : f32 to vector<1x2xf32>
    %75 = arith.mulf %71, %74 : vector<1x2xf32>
    %76 = arith.addf %73, %75 : vector<1x2xf32>
    %77 = vector.broadcast %6 : f32 to vector<1x2xf32>
    %78 = arith.addf %76, %77 : vector<1x2xf32>
    %c1_30 = arith.constant 1 : index
    %c0_31 = arith.constant 0 : index
    %79 = vector.load %arg8[%c1_30, %c0_31] : memref<8x2xf32, #tpu.memory_space<vmem>>, vector<1x2xf32>
    tpu.vector_store %arg8[%c1_30, %c0_31], %78 {strides = array<i32>} : memref<8x2xf32, #tpu.memory_space<vmem>>, vector<1x2xf32>,
    %80 = vector.extract_strided_slice %16 {offsets = [2, 0], sizes = [1, 2], strides = [1, 1]} : vector<8x2xf32> to vector<1x2xf32>
    %81 = vector.broadcast %0 : f32 to vector<1x2xf32>
    %82 = arith.mulf %69, %81 : vector<1x2xf32>
    %83 = arith.addf %80, %82 : vector<1x2xf32>
    %84 = vector.broadcast %1 : f32 to vector<1x2xf32>
    %85 = arith.mulf %71, %84 : vector<1x2xf32>
    %86 = arith.addf %83, %85 : vector<1x2xf32>
    %87 = vector.extract_strided_slice %25 {offsets = [2, 0], sizes = [1, 2], strides = [1, 1]} : vector<8x2xf32> to vector<1x2xf32>
    %88 = vector.broadcast %2 : f32 to vector<1x2xf32>
    %89 = arith.mulf %69, %88 : vector<1x2xf32>
    %90 = arith.addf %87, %89 : vector<1x2xf32>
    %91 = vector.broadcast %3 : f32 to vector<1x2xf32>
    %92 = arith.mulf %71, %91 : vector<1x2xf32>
    %93 = arith.addf %90, %92 : vector<1x2xf32>
    %cst_32 = arith.constant 0.000000e+00 : f32
    %94 = vector.broadcast %cst_32 : f32 to vector<1x2xf32>
    %95 = arith.maximumf %86, %94 : vector<1x2xf32>
    %cst_33 = arith.constant 0.000000e+00 : f32
    %96 = vector.broadcast %cst_33 : f32 to vector<1x2xf32>
    %97 = arith.maximumf %93, %96 : vector<1x2xf32>
    %98 = vector.broadcast %4 : f32 to vector<1x2xf32>
    %99 = arith.mulf %95, %98 : vector<1x2xf32>
    %100 = vector.broadcast %5 : f32 to vector<1x2xf32>
    %101 = arith.mulf %97, %100 : vector<1x2xf32>
    %102 = arith.addf %99, %101 : vector<1x2xf32>
    %103 = vector.broadcast %6 : f32 to vector<1x2xf32>
    %104 = arith.addf %102, %103 : vector<1x2xf32>
    %c2 = arith.constant 2 : index
    %c0_34 = arith.constant 0 : index
    %105 = vector.load %arg8[%c2, %c0_34] : memref<8x2xf32, #tpu.memory_space<vmem>>, vector<1x2xf32>
    tpu.vector_store %arg8[%c2, %c0_34], %104 {strides = array<i32>} : memref<8x2xf32, #tpu.memory_space<vmem>>, vector<1x2xf32>,
    %106 = vector.extract_strided_slice %16 {offsets = [3, 0], sizes = [1, 2], strides = [1, 1]} : vector<8x2xf32> to vector<1x2xf32>
    %107 = vector.broadcast %0 : f32 to vector<1x2xf32>
    %108 = arith.mulf %95, %107 : vector<1x2xf32>
    %109 = arith.addf %106, %108 : vector<1x2xf32>
    %110 = vector.broadcast %1 : f32 to vector<1x2xf32>
    %111 = arith.mulf %97, %110 : vector<1x2xf32>
    %112 = arith.addf %109, %111 : vector<1x2xf32>
    %113 = vector.extract_strided_slice %25 {offsets = [3, 0], sizes = [1, 2], strides = [1, 1]} : vector<8x2xf32> to vector<1x2xf32>
    %114 = vector.broadcast %2 : f32 to vector<1x2xf32>
    %115 = arith.mulf %95, %114 : vector<1x2xf32>
    %116 = arith.addf %113, %115 : vector<1x2xf32>
    %117 = vector.broadcast %3 : f32 to vector<1x2xf32>
    %118 = arith.mulf %97, %117 : vector<1x2xf32>
    %119 = arith.addf %116, %118 : vector<1x2xf32>
    %cst_35 = arith.constant 0.000000e+00 : f32
    %120 = vector.broadcast %cst_35 : f32 to vector<1x2xf32>
    %121 = arith.maximumf %112, %120 : vector<1x2xf32>
    %cst_36 = arith.constant 0.000000e+00 : f32
    %122 = vector.broadcast %cst_36 : f32 to vector<1x2xf32>
    %123 = arith.maximumf %119, %122 : vector<1x2xf32>
    %124 = vector.broadcast %4 : f32 to vector<1x2xf32>
    %125 = arith.mulf %121, %124 : vector<1x2xf32>
    %126 = vector.broadcast %5 : f32 to vector<1x2xf32>
    %127 = arith.mulf %123, %126 : vector<1x2xf32>
    %128 = arith.addf %125, %127 : vector<1x2xf32>
    %129 = vector.broadcast %6 : f32 to vector<1x2xf32>
    %130 = arith.addf %128, %129 : vector<1x2xf32>
    %c3 = arith.constant 3 : index
    %c0_37 = arith.constant 0 : index
    %131 = vector.load %arg8[%c3, %c0_37] : memref<8x2xf32, #tpu.memory_space<vmem>>, vector<1x2xf32>
    tpu.vector_store %arg8[%c3, %c0_37], %130 {strides = array<i32>} : memref<8x2xf32, #tpu.memory_space<vmem>>, vector<1x2xf32>,
    %132 = vector.extract_strided_slice %16 {offsets = [4, 0], sizes = [1, 2], strides = [1, 1]} : vector<8x2xf32> to vector<1x2xf32>
    %133 = vector.broadcast %0 : f32 to vector<1x2xf32>
    %134 = arith.mulf %121, %133 : vector<1x2xf32>
    %135 = arith.addf %132, %134 : vector<1x2xf32>
    %136 = vector.broadcast %1 : f32 to vector<1x2xf32>
    %137 = arith.mulf %123, %136 : vector<1x2xf32>
    %138 = arith.addf %135, %137 : vector<1x2xf32>
    %139 = vector.extract_strided_slice %25 {offsets = [4, 0], sizes = [1, 2], strides = [1, 1]} : vector<8x2xf32> to vector<1x2xf32>
    %140 = vector.broadcast %2 : f32 to vector<1x2xf32>
    %141 = arith.mulf %121, %140 : vector<1x2xf32>
    %142 = arith.addf %139, %141 : vector<1x2xf32>
    %143 = vector.broadcast %3 : f32 to vector<1x2xf32>
    %144 = arith.mulf %123, %143 : vector<1x2xf32>
    %145 = arith.addf %142, %144 : vector<1x2xf32>
    %cst_38 = arith.constant 0.000000e+00 : f32
    %146 = vector.broadcast %cst_38 : f32 to vector<1x2xf32>
    %147 = arith.maximumf %138, %146 : vector<1x2xf32>
    %cst_39 = arith.constant 0.000000e+00 : f32
    %148 = vector.broadcast %cst_39 : f32 to vector<1x2xf32>
    %149 = arith.maximumf %145, %148 : vector<1x2xf32>
    %150 = vector.broadcast %4 : f32 to vector<1x2xf32>
    %151 = arith.mulf %147, %150 : vector<1x2xf32>
    %152 = vector.broadcast %5 : f32 to vector<1x2xf32>
    %153 = arith.mulf %149, %152 : vector<1x2xf32>
    %154 = arith.addf %151, %153 : vector<1x2xf32>
    %155 = vector.broadcast %6 : f32 to vector<1x2xf32>
    %156 = arith.addf %154, %155 : vector<1x2xf32>
    %c4 = arith.constant 4 : index
    %c0_40 = arith.constant 0 : index
    %157 = vector.load %arg8[%c4, %c0_40] : memref<8x2xf32, #tpu.memory_space<vmem>>, vector<1x2xf32>
    tpu.vector_store %arg8[%c4, %c0_40], %156 {strides = array<i32>} : memref<8x2xf32, #tpu.memory_space<vmem>>, vector<1x2xf32>,
    %158 = vector.extract_strided_slice %16 {offsets = [5, 0], sizes = [1, 2], strides = [1, 1]} : vector<8x2xf32> to vector<1x2xf32>
    %159 = vector.broadcast %0 : f32 to vector<1x2xf32>
    %160 = arith.mulf %147, %159 : vector<1x2xf32>
    %161 = arith.addf %158, %160 : vector<1x2xf32>
    %162 = vector.broadcast %1 : f32 to vector<1x2xf32>
    %163 = arith.mulf %149, %162 : vector<1x2xf32>
    %164 = arith.addf %161, %163 : vector<1x2xf32>
    %165 = vector.extract_strided_slice %25 {offsets = [5, 0], sizes = [1, 2], strides = [1, 1]} : vector<8x2xf32> to vector<1x2xf32>
    %166 = vector.broadcast %2 : f32 to vector<1x2xf32>
    %167 = arith.mulf %147, %166 : vector<1x2xf32>
    %168 = arith.addf %165, %167 : vector<1x2xf32>
    %169 = vector.broadcast %3 : f32 to vector<1x2xf32>
    %170 = arith.mulf %149, %169 : vector<1x2xf32>
    %171 = arith.addf %168, %170 : vector<1x2xf32>
    %cst_41 = arith.constant 0.000000e+00 : f32
    %172 = vector.broadcast %cst_41 : f32 to vector<1x2xf32>
    %173 = arith.maximumf %164, %172 : vector<1x2xf32>
    %cst_42 = arith.constant 0.000000e+00 : f32
    %174 = vector.broadcast %cst_42 : f32 to vector<1x2xf32>
    %175 = arith.maximumf %171, %174 : vector<1x2xf32>
    %176 = vector.broadcast %4 : f32 to vector<1x2xf32>
    %177 = arith.mulf %173, %176 : vector<1x2xf32>
    %178 = vector.broadcast %5 : f32 to vector<1x2xf32>
    %179 = arith.mulf %175, %178 : vector<1x2xf32>
    %180 = arith.addf %177, %179 : vector<1x2xf32>
    %181 = vector.broadcast %6 : f32 to vector<1x2xf32>
    %182 = arith.addf %180, %181 : vector<1x2xf32>
    %c5 = arith.constant 5 : index
    %c0_43 = arith.constant 0 : index
    %183 = vector.load %arg8[%c5, %c0_43] : memref<8x2xf32, #tpu.memory_space<vmem>>, vector<1x2xf32>
    tpu.vector_store %arg8[%c5, %c0_43], %182 {strides = array<i32>} : memref<8x2xf32, #tpu.memory_space<vmem>>, vector<1x2xf32>,
    %184 = vector.extract_strided_slice %16 {offsets = [6, 0], sizes = [1, 2], strides = [1, 1]} : vector<8x2xf32> to vector<1x2xf32>
    %185 = vector.broadcast %0 : f32 to vector<1x2xf32>
    %186 = arith.mulf %173, %185 : vector<1x2xf32>
    %187 = arith.addf %184, %186 : vector<1x2xf32>
    %188 = vector.broadcast %1 : f32 to vector<1x2xf32>
    %189 = arith.mulf %175, %188 : vector<1x2xf32>
    %190 = arith.addf %187, %189 : vector<1x2xf32>
    %191 = vector.extract_strided_slice %25 {offsets = [6, 0], sizes = [1, 2], strides = [1, 1]} : vector<8x2xf32> to vector<1x2xf32>
    %192 = vector.broadcast %2 : f32 to vector<1x2xf32>
    %193 = arith.mulf %173, %192 : vector<1x2xf32>
    %194 = arith.addf %191, %193 : vector<1x2xf32>
    %195 = vector.broadcast %3 : f32 to vector<1x2xf32>
    %196 = arith.mulf %175, %195 : vector<1x2xf32>
    %197 = arith.addf %194, %196 : vector<1x2xf32>
    %cst_44 = arith.constant 0.000000e+00 : f32
    %198 = vector.broadcast %cst_44 : f32 to vector<1x2xf32>
    %199 = arith.maximumf %190, %198 : vector<1x2xf32>
    %cst_45 = arith.constant 0.000000e+00 : f32
    %200 = vector.broadcast %cst_45 : f32 to vector<1x2xf32>
    %201 = arith.maximumf %197, %200 : vector<1x2xf32>
    %202 = vector.broadcast %4 : f32 to vector<1x2xf32>
    %203 = arith.mulf %199, %202 : vector<1x2xf32>
    %204 = vector.broadcast %5 : f32 to vector<1x2xf32>
    %205 = arith.mulf %201, %204 : vector<1x2xf32>
    %206 = arith.addf %203, %205 : vector<1x2xf32>
    %207 = vector.broadcast %6 : f32 to vector<1x2xf32>
    %208 = arith.addf %206, %207 : vector<1x2xf32>
    %c6 = arith.constant 6 : index
    %c0_46 = arith.constant 0 : index
    %209 = vector.load %arg8[%c6, %c0_46] : memref<8x2xf32, #tpu.memory_space<vmem>>, vector<1x2xf32>
    tpu.vector_store %arg8[%c6, %c0_46], %208 {strides = array<i32>} : memref<8x2xf32, #tpu.memory_space<vmem>>, vector<1x2xf32>,
    %210 = vector.extract_strided_slice %16 {offsets = [7, 0], sizes = [1, 2], strides = [1, 1]} : vector<8x2xf32> to vector<1x2xf32>
    %211 = vector.broadcast %0 : f32 to vector<1x2xf32>
    %212 = arith.mulf %199, %211 : vector<1x2xf32>
    %213 = arith.addf %210, %212 : vector<1x2xf32>
    %214 = vector.broadcast %1 : f32 to vector<1x2xf32>
    %215 = arith.mulf %201, %214 : vector<1x2xf32>
    %216 = arith.addf %213, %215 : vector<1x2xf32>
    %217 = vector.extract_strided_slice %25 {offsets = [7, 0], sizes = [1, 2], strides = [1, 1]} : vector<8x2xf32> to vector<1x2xf32>
    %218 = vector.broadcast %2 : f32 to vector<1x2xf32>
    %219 = arith.mulf %199, %218 : vector<1x2xf32>
    %220 = arith.addf %217, %219 : vector<1x2xf32>
    %221 = vector.broadcast %3 : f32 to vector<1x2xf32>
    %222 = arith.mulf %201, %221 : vector<1x2xf32>
    %223 = arith.addf %220, %222 : vector<1x2xf32>
    %cst_47 = arith.constant 0.000000e+00 : f32
    %224 = vector.broadcast %cst_47 : f32 to vector<1x2xf32>
    %225 = arith.maximumf %216, %224 : vector<1x2xf32>
    %cst_48 = arith.constant 0.000000e+00 : f32
    %226 = vector.broadcast %cst_48 : f32 to vector<1x2xf32>
    %227 = arith.maximumf %223, %226 : vector<1x2xf32>
    %228 = vector.broadcast %4 : f32 to vector<1x2xf32>
    %229 = arith.mulf %225, %228 : vector<1x2xf32>
    %230 = vector.broadcast %5 : f32 to vector<1x2xf32>
    %231 = arith.mulf %227, %230 : vector<1x2xf32>
    %232 = arith.addf %229, %231 : vector<1x2xf32>
    %233 = vector.broadcast %6 : f32 to vector<1x2xf32>
    %234 = arith.addf %232, %233 : vector<1x2xf32>
    %c7 = arith.constant 7 : index
    %c0_49 = arith.constant 0 : index
    %235 = vector.load %arg8[%c7, %c0_49] : memref<8x2xf32, #tpu.memory_space<vmem>>, vector<1x2xf32>
    tpu.vector_store %arg8[%c7, %c0_49], %234 {strides = array<i32>} : memref<8x2xf32, #tpu.memory_space<vmem>>, vector<1x2xf32>,
    %c0_50 = arith.constant 0 : index
    %c0_51 = arith.constant 0 : index
    %236 = vector.load %arg9[%c0_50, %c0_51] : memref<2x2xf32, #tpu.memory_space<vmem>>, vector<1x2xf32>
    tpu.vector_store %arg9[%c0_50, %c0_51], %225 {strides = array<i32>} : memref<2x2xf32, #tpu.memory_space<vmem>>, vector<1x2xf32>,
    %c1_52 = arith.constant 1 : index
    %c0_53 = arith.constant 0 : index
    %237 = vector.load %arg9[%c1_52, %c0_53] : memref<2x2xf32, #tpu.memory_space<vmem>>, vector<1x2xf32>
    tpu.vector_store %arg9[%c1_52, %c0_53], %227 {strides = array<i32>} : memref<2x2xf32, #tpu.memory_space<vmem>>, vector<1x2xf32>,
    return
  }
}

</mosaic_0001>

<llo_original>
// kernel: tpu_custom_call.1
$region0: #{tpu_custom_call.1}
  #allocation0 [shape = 'u32[]', space=smem, size = 0x4, offset = 0x4, fixed_abs, tag = 'smem constant byte address 0x4 - core index']
  #allocation1 [shape = 'u32[72,128]{1,0:T(1,128)}', space=vmem, size = 0x9000, scoped, tag = 'internal scratch']
  #allocation2 [shape = 'f32[1]{0:T(128)S(6)}', space=smem, size = 0x200, scoped, tag = 'scoped memory for tpu_custom_call.1']
  %s0 = inlined_call_operand.vmem [shape: f32[8,2], index: 0, kind: input, shape index: {}]
  %s1 = inlined_call_operand.vmem [shape: f32[2,2], index: 1, kind: input, shape index: {}]
  %s2 = inlined_call_operand.vmem [shape: f32[2,1], index: 2, kind: input, shape index: {}]
  %s3 = inlined_call_operand.vmem [shape: f32[2,2], index: 3, kind: input, shape index: {}]
  %s4 = inlined_call_operand.vmem [shape: f32[2], index: 4, kind: input, shape index: {}]
  %s5 = inlined_call_operand.vmem [shape: f32[2], index: 5, kind: input, shape index: {}]
  %s6 = inlined_call_operand.vmem [shape: f32[1,2], index: 6, kind: input, shape index: {}]
  %s7 = inlined_call_operand.<no memory space> [shape: f32[1], index: 7, kind: input, shape index: {}]
  %s8 = inlined_call_operand.vmem [shape: f32[8,2], index: 8, kind: output, shape index: {0}]
  %s9 = inlined_call_operand.hbm [shape: f32[2,2], index: 9, kind: output, shape index: {1}]
  %10 = xla_tuple %s8, %s9
  %s11 = sld [smem:[#allocation0]]
  $region70: #{tpu_custom_call.1} parent=0
    _
  %s13 = ssub.s32 1, %s11
  %s14 = scalar_select 0, %s13, %s11
  %15 = sst [smem:[#allocation2]] %s7
  $region1: #{tpu_custom_call.1} parent=0
    #allocation3 [shape = 'u8[1024]{0}', space=smem, size = 0x400, scoped, tag = 'input window, operand 2, single buffered']
    #allocation4 [shape = 's32[1]{0}', space=sflag, size = 0x4, scoped, tag = 'scoped memory for tpu_custom_call.1']
    #allocation5 [shape = 's32[1]{0}', space=sflag, size = 0x4, scoped, tag = 'scoped memory for tpu_custom_call.1']
    #allocation6 [shape = 'u8[1024]{0}', space=smem, size = 0x400, scoped, tag = 'input window, operand 3, single buffered']
    #allocation7 [shape = 's32[1]{0}', space=sflag, size = 0x4, scoped, tag = 'scoped memory for tpu_custom_call.1']
    #allocation8 [shape = 'u8[512]{0}', space=smem, size = 0x200, scoped, tag = 'input window, operand 4, single buffered']
    #allocation9 [shape = 'u8[512]{0}', space=smem, size = 0x200, scoped, tag = 'input window, operand 5, single buffered']
    #allocation10 [shape = 's32[1]{0}', space=sflag, size = 0x4, scoped, tag = 'scoped memory for tpu_custom_call.1']
    #allocation11 [shape = 'u8[512]{0}', space=smem, size = 0x200, scoped, tag = 'input window, operand 6, single buffered']
    #allocation12 [shape = 'u8[1024]{0}', space=vmem, size = 0x400, scoped, tag = 'output window, operand 1, single buffered']
    %16 = vsyncpa [#allocation5], 0
    %17 = vsyncpa [#allocation7], 0
    %18 = vsyncpa [#allocation10], 0
    %19 = vsyncpa [#allocation4], 0
    // Predicated region
    $region2: #{tpu_custom_call.1} parent=1 // pred_check
      _
    $region3: #{tpu_custom_call.1} parent=1 // pred_check_branch
      %21 = sbr.rel (0) target = $region5
    $region4: #{tpu_custom_call.1} parent=1 // pred_region
      _
    $region5: #{tpu_custom_call.1} parent=1 // pred_fallthru
      _
    // Predicated region
    $region6: #{tpu_custom_call.1} parent=1 // pred_check
      _
    $region7: #{tpu_custom_call.1} parent=1 // pred_check_branch
      %23 = sbr.rel (0) target = $region9
    $region8: #{tpu_custom_call.1} parent=1 // pred_region
      _
    $region9: #{tpu_custom_call.1} parent=1 // pred_fallthru
      _
    // Predicated region
    $region10: #{tpu_custom_call.1} parent=1 // pred_check
      _
    $region11: #{tpu_custom_call.1} parent=1 // pred_check_branch
      %25 = sbr.rel (0) target = $region13
    $region12: #{tpu_custom_call.1} parent=1 // pred_region
      %27 = vsyncadd [#allocation5], 0
      %s29 = sshll.u32 %s2, 4
      %s30 = int_to_ptr.vmem [resolvable:$true] %s29
      %32 = dma.vmem_to_smem %s30, 32, [#allocation3], [#allocation5]
    $region13: #{tpu_custom_call.1} parent=1 // pred_fallthru
      _
    // Predicated region
    $region14: #{tpu_custom_call.1} parent=1 // pred_check
      _
    $region15: #{tpu_custom_call.1} parent=1 // pred_check_branch
      %34 = sbr.rel (0) target = $region17
    $region16: #{tpu_custom_call.1} parent=1 // pred_region
      %36 = vsyncadd [#allocation7], 0
      %s38 = sshll.u32 %s3, 4
      %s39 = int_to_ptr.vmem [resolvable:$true] %s38
      %41 = dma.vmem_to_smem %s39, 32, [#allocation6], [#allocation7]
    $region17: #{tpu_custom_call.1} parent=1 // pred_fallthru
      _
    // Predicated region
    $region18: #{tpu_custom_call.1} parent=1 // pred_check
      _
    $region19: #{tpu_custom_call.1} parent=1 // pred_check_branch
      %43 = sbr.rel (0) target = $region21
    $region20: #{tpu_custom_call.1} parent=1 // pred_region
      %45 = vsyncadd [#allocation7], 0
      %s47 = sshll.u32 %s4, 4
      %s48 = int_to_ptr.vmem [resolvable:$true] %s47
      %50 = dma.vmem_to_smem %s48, 16, [#allocation8], [#allocation7]
    $region21: #{tpu_custom_call.1} parent=1 // pred_fallthru
      _
    // Predicated region
    $region22: #{tpu_custom_call.1} parent=1 // pred_check
      _
    $region23: #{tpu_custom_call.1} parent=1 // pred_check_branch
      %52 = sbr.rel (0) target = $region25
    $region24: #{tpu_custom_call.1} parent=1 // pred_region
      %54 = vsyncadd [#allocation10], 0
      %s56 = sshll.u32 %s5, 4
      %s57 = int_to_ptr.vmem [resolvable:$true] %s56
      %59 = dma.vmem_to_smem %s57, 16, [#allocation9], [#allocation10]
    $region25: #{tpu_custom_call.1} parent=1 // pred_fallthru
      _
    // Predicated region
    $region26: #{tpu_custom_call.1} parent=1 // pred_check
      _
    $region27: #{tpu_custom_call.1} parent=1 // pred_check_branch
      %61 = sbr.rel (0) target = $region29
    $region28: #{tpu_custom_call.1} parent=1 // pred_region
      %63 = vsyncadd [#allocation10], 0
      %s65 = sshll.u32 %s6, 4
      %s66 = int_to_ptr.vmem [resolvable:$true] %s65
      %68 = dma.vmem_to_smem %s66, 16, [#allocation11], [#allocation10]
    $region29: #{tpu_custom_call.1} parent=1 // pred_fallthru
      _
    // Predicated region
    $region30: #{tpu_custom_call.1} parent=1 // pred_check
      _
    $region31: #{tpu_custom_call.1} parent=1 // pred_check_branch
      %70 = sbr.rel (0) target = $region33
    $region32: #{tpu_custom_call.1} parent=1 // pred_region
      _
    $region33: #{tpu_custom_call.1} parent=1 // pred_fallthru
      _
    // Predicated region
    $region34: #{tpu_custom_call.1} parent=1 // pred_check
      _
    $region35: #{tpu_custom_call.1} parent=1 // pred_check_branch
      %72 = sbr.rel (0) target = $region37
    $region36: #{tpu_custom_call.1} parent=1 // pred_region
      %74 = dma.done [#allocation5], 32
    $region37: #{tpu_custom_call.1} parent=1 // pred_fallthru
      _
    // Predicated region
    $region38: #{tpu_custom_call.1} parent=1 // pred_check
      _
    $region39: #{tpu_custom_call.1} parent=1 // pred_check_branch
      %76 = sbr.rel (0) target = $region41
    $region40: #{tpu_custom_call.1} parent=1 // pred_region
      %78 = dma.done [#allocation7], 32
    $region41: #{tpu_custom_call.1} parent=1 // pred_fallthru
      _
    // Predicated region
    $region42: #{tpu_custom_call.1} parent=1 // pred_check
      _
    $region43: #{tpu_custom_call.1} parent=1 // pred_check_branch
      %80 = sbr.rel (0) target = $region45
    $region44: #{tpu_custom_call.1} parent=1 // pred_region
      %82 = dma.done [#allocation7], 16
    $region45: #{tpu_custom_call.1} parent=1 // pred_fallthru
      _
    // Predicated region
    $region46: #{tpu_custom_call.1} parent=1 // pred_check
      _
    $region47: #{tpu_custom_call.1} parent=1 // pred_check_branch
      %84 = sbr.rel (0) target = $region49
    $region48: #{tpu_custom_call.1} parent=1 // pred_region
      %86 = dma.done [#allocation10], 16
    $region49: #{tpu_custom_call.1} parent=1 // pred_fallthru
      _
    // Predicated region
    $region50: #{tpu_custom_call.1} parent=1 // pred_check
      _
    $region51: #{tpu_custom_call.1} parent=1 // pred_check_branch
      %88 = sbr.rel (0) target = $region53
    $region52: #{tpu_custom_call.1} parent=1 // pred_region
      %90 = dma.done [#allocation10], 16
    $region53: #{tpu_custom_call.1} parent=1 // pred_fallthru
      _
    %91 = sfence
    %s92 = sld [smem:[#allocation6]]
    %s93 = sld [smem:[#allocation6 + $0x1]]
    %s94 = sld [smem:[#allocation6 + $0x80]]
    %s95 = sld [smem:[#allocation6 + $0x81]]
    %s96 = sld [smem:[#allocation11]]
    %s97 = sld [smem:[#allocation11 + $0x1]]
    %s98 = sld [smem:[#allocation2]]
    %v99 = vld [vmem:[%s0] sm:$0xff]
    %s100 = sld [smem:[#allocation3]]
    %v101 = vstv %s100
    %v102 = vmul.f32 %v99, %v101
    %s103 = sld [smem:[#allocation8]]
    %v104 = vstv %s103
    %v105 = vadd.f32 %v102, %v104
    %s106 = sld [smem:[#allocation9]]
    %v107 = vstv %s106
    %v108 = vadd.f32 %v105, %v107
    %s109 = sld [smem:[#allocation3 + $0x80]]
    %v110 = vstv %s109
    %v111 = vmul.f32 %v99, %v110
    %s112 = sld [smem:[#allocation8 + $0x1]]
    %v113 = vstv %s112
    %v114 = vadd.f32 %v111, %v113
    %s115 = sld [smem:[#allocation9 + $0x1]]
    %v116 = vstv %s115
    %v117 = vadd.f32 %v114, %v116
    %v118 = vld [vmem:[%s1] sm:$0x1]
    %v119 = vld [vmem:[%s1 + $0x1] sm:$0x1]
    %v120 = vstv %s92
    %v121 = vmul.f32 %v118, %v120
    %v122 = vadd.f32 %v108, %v121
    %v123 = vstv %s93
    %v124 = vmul.f32 %v119, %v123
    %v125 = vadd.f32 %v122, %v124
    %v126 = vstv %s94
    %v127 = vmul.f32 %v118, %v126
    %v128 = vadd.f32 %v117, %v127
    %v129 = vstv %s95
    %v130 = vmul.f32 %v119, %v129
    %v131 = vadd.f32 %v128, %v130
    %v132 = vmax.f32 %v125, 0.0
    %v133 = vmax.f32 %v131, 0.0
    %v134 = vstv %s96
    %v135 = vmul.f32 %v132, %v134
    %v136 = vstv %s97
    %v137 = vmul.f32 %v133, %v136
    %v138 = vadd.f32 %v135, %v137
    %v139 = vstv %s98
    %v140 = vadd.f32 %v138, %v139
    %vm141 = vcmask 8192
    %142 = vst.msk [vmem:[%s8] sm:$0x1] %vm141, %v140
    %v143 = vmul.f32 %v132, %v120
    %v145 = vrot.slane %v143, 7
    %v147 = vadd.f32 %v108, %v145
    %v148 = vmul.f32 %v133, %v123
    %v150 = vrot.slane %v148, 7
    %v152 = vadd.f32 %v147, %v150
    %v153 = vmul.f32 %v132, %v126
    %v155 = vrot.slane %v153, 7
    %v157 = vadd.f32 %v117, %v155
    %v158 = vmul.f32 %v133, %v129
    %v160 = vrot.slane %v158, 7
    %v162 = vadd.f32 %v157, %v160
    %v163 = vmax.f32 %v152, 0.0
    %v164 = vmax.f32 %v162, 0.0
    %v165 = vmul.f32 %v163, %v134
    %v166 = vmul.f32 %v164, %v136
    %v167 = vadd.f32 %v165, %v166
    %v168 = vadd.f32 %v167, %v139
    %vm169 = vcmask 9217
    %170 = vst.msk [vmem:[%s8] sm:$0x2] %vm169, %v168
    %v171 = vmul.f32 %v163, %v120
    %v173 = vrot.slane %v171, 7
    %v175 = vadd.f32 %v108, %v173
    %v176 = vmul.f32 %v164, %v123
    %v178 = vrot.slane %v176, 7
    %v180 = vadd.f32 %v175, %v178
    %v181 = vmul.f32 %v163, %v126
    %v183 = vrot.slane %v181, 7
    %v185 = vadd.f32 %v117, %v183
    %v186 = vmul.f32 %v164, %v129
    %v188 = vrot.slane %v186, 7
    %v190 = vadd.f32 %v185, %v188
    %v191 = vmax.f32 %v180, 0.0
    %v192 = vmax.f32 %v190, 0.0
    %v193 = vmul.f32 %v191, %v134
    %v194 = vmul.f32 %v192, %v136
    %v195 = vadd.f32 %v193, %v194
    %v196 = vadd.f32 %v195, %v139
    %vm197 = vcmask 10242
    %198 = vst.msk [vmem:[%s8] sm:$0x4] %vm197, %v196
    %v199 = vmul.f32 %v191, %v120
    %v201 = vrot.slane %v199, 7
    %v203 = vadd.f32 %v108, %v201
    %v204 = vmul.f32 %v192, %v123
    %v206 = vrot.slane %v204, 7
    %v208 = vadd.f32 %v203, %v206
    %v209 = vmul.f32 %v191, %v126
    %v211 = vrot.slane %v209, 7
    %v213 = vadd.f32 %v117, %v211
    %v214 = vmul.f32 %v192, %v129
    %v216 = vrot.slane %v214, 7
    %v218 = vadd.f32 %v213, %v216
    %v219 = vmax.f32 %v208, 0.0
    %v220 = vmax.f32 %v218, 0.0
    %v221 = vmul.f32 %v219, %v134
    %v222 = vmul.f32 %v220, %v136
    %v223 = vadd.f32 %v221, %v222
    %v224 = vadd.f32 %v223, %v139
    %vm225 = vcmask 11267
    %226 = vst.msk [vmem:[%s8] sm:$0x8] %vm225, %v224
    %v227 = vmul.f32 %v219, %v120
    %v229 = vrot.slane %v227, 7
    %v231 = vadd.f32 %v108, %v229
    %v232 = vmul.f32 %v220, %v123
    %v234 = vrot.slane %v232, 7
    %v236 = vadd.f32 %v231, %v234
    %v237 = vmul.f32 %v219, %v126
    %v239 = vrot.slane %v237, 7
    %v241 = vadd.f32 %v117, %v239
    %v242 = vmul.f32 %v220, %v129
    %v244 = vrot.slane %v242, 7
    %v246 = vadd.f32 %v241, %v244
    %v247 = vmax.f32 %v236, 0.0
    %v248 = vmax.f32 %v246, 0.0
    %v249 = vmul.f32 %v247, %v134
    %v250 = vmul.f32 %v248, %v136
    %v251 = vadd.f32 %v249, %v250
    %v252 = vadd.f32 %v251, %v139
    %vm253 = vcmask 12292
    %254 = vst.msk [vmem:[%s8] sm:$0x10] %vm253, %v252
    %v255 = vmul.f32 %v247, %v120
    %v257 = vrot.slane %v255, 7
    %v259 = vadd.f32 %v108, %v257
    %v260 = vmul.f32 %v248, %v123
    %v262 = vrot.slane %v260, 7
    %v264 = vadd.f32 %v259, %v262
    %v265 = vmul.f32 %v247, %v126
    %v267 = vrot.slane %v265, 7
    %v269 = vadd.f32 %v117, %v267
    %v270 = vmul.f32 %v248, %v129
    %v272 = vrot.slane %v270, 7
    %v274 = vadd.f32 %v269, %v272
    %v275 = vmax.f32 %v264, 0.0
    %v276 = vmax.f32 %v274, 0.0
    %v277 = vmul.f32 %v275, %v134
    %v278 = vmul.f32 %v276, %v136
    %v279 = vadd.f32 %v277, %v278
    %v280 = vadd.f32 %v279, %v139
    %vm281 = vcmask 13317
    %282 = vst.msk [vmem:[%s8] sm:$0x20] %vm281, %v280
    %v283 = vmul.f32 %v275, %v120
    %v285 = vrot.slane %v283, 7
    %v287 = vadd.f32 %v108, %v285
    %v288 = vmul.f32 %v276, %v123
    %v290 = vrot.slane %v288, 7
    %v292 = vadd.f32 %v287, %v290
    %v293 = vmul.f32 %v275, %v126
    %v295 = vrot.slane %v293, 7
    %v297 = vadd.f32 %v117, %v295
    %v298 = vmul.f32 %v276, %v129
    %v300 = vrot.slane %v298, 7
    %v302 = vadd.f32 %v297, %v300
    %v303 = vmax.f32 %v292, 0.0
    %v304 = vmax.f32 %v302, 0.0
    %v305 = vmul.f32 %v303, %v134
    %v306 = vmul.f32 %v304, %v136
    %v307 = vadd.f32 %v305, %v306
    %v308 = vadd.f32 %v307, %v139
    %vm309 = vcmask 14342
    %310 = vst.msk [vmem:[%s8] sm:$0x40] %vm309, %v308
    %v311 = vmul.f32 %v303, %v120
    %v313 = vrot.slane %v311, 7
    %v315 = vadd.f32 %v108, %v313
    %v316 = vmul.f32 %v304, %v123
    %v318 = vrot.slane %v316, 7
    %v320 = vadd.f32 %v315, %v318
    %v321 = vmul.f32 %v303, %v126
    %v323 = vrot.slane %v321, 7
    %v325 = vadd.f32 %v117, %v323
    %v326 = vmul.f32 %v304, %v129
    %v328 = vrot.slane %v326, 7
    %v330 = vadd.f32 %v325, %v328
    %v331 = vmax.f32 %v320, 0.0
    %v332 = vmax.f32 %v330, 0.0
    %v333 = vmul.f32 %v331, %v134
    %v334 = vmul.f32 %v332, %v136
    %v335 = vadd.f32 %v333, %v334
    %v336 = vadd.f32 %v335, %v139
    %vm337 = vcmask 15367
    %338 = vst.msk [vmem:[%s8] sm:$0x80] %vm337, %v336
    %339 = vst.msk [vmem:[#allocation12 - $0x7] sm:$0x80] %vm337, %v331
    %340 = vst.msk [vmem:[#allocation12 - $0x6] sm:$0x80] %vm337, %v332
    // Predicated region
    $region54: #{tpu_custom_call.1} parent=1 // pred_check
      _
    $region55: #{tpu_custom_call.1} parent=1 // pred_check_branch
      %342 = sbr.rel (0) target = $region57
    $region56: #{tpu_custom_call.1} parent=1 // pred_region
      _
    $region57: #{tpu_custom_call.1} parent=1 // pred_fallthru
      _
    // Predicated region
    $region58: #{tpu_custom_call.1} parent=1 // pred_check
      _
    $region59: #{tpu_custom_call.1} parent=1 // pred_check_branch
      %344 = sbr.rel (0) target = $region61
    $region60: #{tpu_custom_call.1} parent=1 // pred_region
      %346 = vsyncadd [#allocation4], 0
      %s348 = sshll.u32 [#allocation12], 4
      %s349 = int_to_ptr.vmem [resolvable:$true] %s348
      %s350 = sshll.u32 %s9, 4
      %s351 = int_to_ptr.hbm [resolvable:$true] %s350
      %353 = dma.vmem_to_hbm [thread:$0]  %s349, 32, %s351, [#allocation4]
    $region61: #{tpu_custom_call.1} parent=1 // pred_fallthru
      _
    // Predicated region
    $region62: #{tpu_custom_call.1} parent=1 // pred_check
      _
    $region63: #{tpu_custom_call.1} parent=1 // pred_check_branch
      %355 = sbr.rel (0) target = $region65
    $region64: #{tpu_custom_call.1} parent=1 // pred_region
      _
    $region65: #{tpu_custom_call.1} parent=1 // pred_fallthru
      _
    // Predicated region
    $region66: #{tpu_custom_call.1} parent=1 // pred_check
      _
    $region67: #{tpu_custom_call.1} parent=1 // pred_check_branch
      %357 = sbr.rel (0) target = $region69
    $region68: #{tpu_custom_call.1} parent=1 // pred_region
      %359 = dma.done [#allocation4], 32
    $region69: #{tpu_custom_call.1} parent=1 // pred_fallthru
      _
    %360 = vsyncpa [#allocation4], 1
    %361 = vsyncpa [#allocation5], 1
    %362 = vsyncpa [#allocation7], 1
    %363 = vsyncpa [#allocation10], 1

</llo_original>
